<compile_context>
chip_gen: v5e
topology: v5e:2x2
jax: 0.10.0
libtpu: 0.0.40
codegen_flags: <defaults>
</compile_context>

<pallas_src>
import functools

import jax
import jax.numpy as jnp
from jax.experimental import pallas as pl
from jax.experimental.pallas import tpu as pltpu


def _mlp_kernel(x_ref, w1_ref, b1_ref, w2_ref, b2_ref,
                w3_ref, b3_ref, w4_ref, b4_ref, o_ref, *, compute_dtype):
    # x_ref : (tile_b, D)  -- raw slab of the (B, D) input, contiguous in HBM
    # wN    : (out, in)    -- PyTorch-native Linear weight
    # bN    : (out, 1)
    # w4_ref: (32, 1) column, b4_ref: (1, 1)
    cd = compute_dtype
    x = x_ref[...].astype(cd)

    # Layer 1: contract the shared feature dim (lhs dim 1 with rhs dim 1).
    # Mosaic inserts the in-kernel XLU transpose of the (tile_b, D) slab, so
    # the batch dimension lands on the lane axis with no host-side x.T pass.
    h = jax.lax.dot_general(
        w1_ref[...].astype(cd), x,
        dimension_numbers=(((1,), (1,)), ((), ())),
        preferred_element_type=jnp.float32) + b1_ref[...]
    h = jnp.maximum(h, 0.0)                                   # (64, tile_b)

    h = jnp.dot(w2_ref[...].astype(cd), h.astype(cd),
                preferred_element_type=jnp.float32) + b2_ref[...]
    h = jnp.maximum(h, 0.0)                                   # (64, tile_b)

    h = jnp.dot(w3_ref[...].astype(cd), h.astype(cd),
                preferred_element_type=jnp.float32) + b3_ref[...]
    h = jnp.maximum(h, 0.0)                                   # (32, tile_b)

    # Final 32 -> 1 layer off the MXU: VPU multiply + XLU sublane reduce.
    # Result is already the lane-dense (1, tile_b) output row.
    logits = jnp.sum(h * w4_ref[...], axis=0, keepdims=True) + b4_ref[...]

    # exp on the EUP; the single-row divide is negligible.
    o_ref[...] = 1.0 / (1.0 + jnp.exp(-logits))


def _round_up(n, m):
    return ((n + m - 1) // m) * m


def _tensorcores_per_device():
    """Best-effort TC-per-device count (trace-time Python, not traced)."""
    try:
        kind = jax.devices()[0].device_kind.lower()
    except Exception:
        return 1
    if "lite" in kind or "v5e" in kind or "v6e" in kind or "v6 " in kind:
        return 1
    if "v2" in kind or "v3" in kind:
        return 1
    if "v4" in kind or "v5p" in kind or "7x" in kind or "tpu7" in kind or "v7" in kind:
        return 2  # megacore / dual-TC parts
    return 1


def _pick_tile(B, tile_b_req, two_cores):
    """Lane-dense (multiple of 128) batch tile, generation-aware."""
    tile_b_req = max(128, (int(tile_b_req) // 128) * 128)
    if (not two_cores) or B <= 128:
        # Single TensorCore: extra grid steps only add ~0.35us each with no
        # overlap benefit -> use one maximal tile for small B.
        return min(tile_b_req, _round_up(B, 128))
    # Two TensorCores: want an even, balanced step count >= 2 so the
    # "parallel" grid axis shards cleanly across both cores.
    steps = max(2, _round_up(pl.cdiv(B, tile_b_req), 2))
    tile_b = _round_up(pl.cdiv(B, steps), 128)
    if pl.cdiv(B, tile_b) % 2 == 1:
        # 128-lane granularity made the step count odd -> fall back to exactly
        # two (balanced) steps.
        tile_b = _round_up(pl.cdiv(B, 2), 128)
    return tile_b


@functools.partial(jax.jit, static_argnames=("tile_b", "use_bf16"))
def discriminator_forward(x, params, *, tile_b=1024, use_bf16=False):
    """x: (B, input_size) float32. Returns sigmoid(MLP(x)) of shape (B, 1)."""
    w1, b1, w2, b2, w3, b3, w4, b4 = params
    B, D = x.shape

    two_cores = _tensorcores_per_device() >= 2
    tile_b = _pick_tile(B, tile_b, two_cores)
    grid = (pl.cdiv(B, tile_b),)   # ragged last block handled by masked DMA/store

    # Last layer reshaped for the VPU/XLU path: (32, 1) column + (1, 1) bias.
    w4_col = w4.T                  # torch W4 is (1, 32)
    b4_11 = b4.reshape(1, 1)

    compute_dtype = jnp.bfloat16 if use_bf16 else jnp.float32

    def full_spec(arr):
        # Small constant operand: one full block, same index at every grid
        # step (Pallas dedupes the copy across steps).
        return pl.BlockSpec(arr.shape, lambda i: (0, 0))

    out = pl.pallas_call(
        functools.partial(_mlp_kernel, compute_dtype=compute_dtype),
        out_shape=jax.ShapeDtypeStruct((1, B), jnp.float32),
        grid_spec=pltpu.PrefetchScalarGridSpec(
            num_scalar_prefetch=0,
            grid=grid,
            in_specs=[
                pl.BlockSpec((tile_b, D), lambda i: (i, 0)),   # contiguous slab
                full_spec(w1), full_spec(b1),
                full_spec(w2), full_spec(b2),
                full_spec(w3), full_spec(b3),
                full_spec(w4_col), full_spec(b4_11),
            ],
            out_specs=pl.BlockSpec((1, tile_b), lambda i: (0, i)),  # lane-dense row
        ),
        compiler_params=pltpu.CompilerParams(
            dimension_semantics=("parallel",)),
    )(x, w1, b1, w2, b2, w3, b3, w4_col, b4_11)

    return out.reshape(B, 1)


def init_params(key, input_size):
    """PyTorch-native shapes: Linear(in, out) -> W:(out, in), b:(out, 1)."""
    dims = [(input_size, 64), (64, 64), (64, 32), (32, 1)]
    params = []
    for fan_in, fan_out in dims:
        key, k_w, k_b = jax.random.split(key, 3)
        bound = 1.0 / (fan_in ** 0.5)   # PyTorch default uniform bound
        w = jax.random.uniform(k_w, (fan_out, fan_in), jnp.float32, -bound, bound)
        b = jax.random.uniform(k_b, (fan_out, 1), jnp.float32, -bound, bound)
        params += [w, b]
    return tuple(params)


def reference_forward(x, params):
    w1, b1, w2, b2, w3, b3, w4, b4 = params
    h = jnp.maximum(x @ w1.T + b1.T, 0.0)
    h = jnp.maximum(h @ w2.T + b2.T, 0.0)
    h = jnp.maximum(h @ w3.T + b3.T, 0.0)
    return 1.0 / (1.0 + jnp.exp(-(h @ w4.T + b4.T)))


if __name__ == "__main__":
    key = jax.random.PRNGKey(0)
    input_size = 16
    batch = 512

    k_x, k_p = jax.random.split(key)
    x = jax.random.normal(k_x, (batch, input_size), jnp.float32)
    params = init_params(k_p, input_size)

    # Default f32 path (exact parity with the PyTorch/JAX reference).
    out = jax.block_until_ready(discriminator_forward(x, params))
    ref = reference_forward(x, params)
    assert out.shape == (batch, 1)
    assert jnp.allclose(out, ref, atol=1e-5, rtol=1e-5), "mismatch vs JAX reference"

    # Ragged batch: exercises the masked last block (no host pad / transpose).
    x2 = jax.random.normal(k_x, (300, input_size), jnp.float32)
    out2 = jax.block_until_ready(discriminator_forward(x2, params, tile_b=128))
    ref2 = reference_forward(x2, params)
    assert out2.shape == (300, 1)
    assert jnp.allclose(out2, ref2, atol=1e-5, rtol=1e-5), "ragged-batch mismatch"

    # Opt-in bf16 MXU path (f32 accumulation); looser tolerance by design.
    out3 = jax.block_until_ready(discriminator_forward(x, params, use_bf16=True))
    assert jnp.allclose(out3, ref, atol=2e-2, rtol=2e-2), "bf16-path mismatch"

    print("KERNEL_OK")
</pallas_src>

<mosaic_0001>
module attributes {stable_mosaic.version = 11 : i64} {
  func.func @_mlp_kernel(%arg0: i32, %arg1: memref<512x16xf32, #tpu.memory_space<vmem>>, %arg2: memref<64x16xf32, #tpu.memory_space<vmem>>, %arg3: memref<64x1xf32, #tpu.memory_space<vmem>>, %arg4: memref<64x64xf32, #tpu.memory_space<vmem>>, %arg5: memref<64x1xf32, #tpu.memory_space<vmem>>, %arg6: memref<32x64xf32, #tpu.memory_space<vmem>>, %arg7: memref<32x1xf32, #tpu.memory_space<vmem>>, %arg8: memref<32x1xf32, #tpu.memory_space<vmem>>, %arg9: memref<1x1xf32, #tpu.memory_space<vmem>>, %arg10: memref<1x512xf32, #tpu.memory_space<vmem>>) attributes {dimension_semantics = [#tpu.dimension_semantics<parallel>], iteration_bounds = array<i64: 1>, scalar_prefetch = 0 : i64, scratch_operands = 0 : i64, tpu.core_type = #tpu.core_type<tc>, window_params = [{transform_indices = @transform_0, window_bounds = array<i64: 512, 16>}, {pipeline_mode = #tpu.pipeline_mode<synchronous>, transform_indices = @transform_1, window_bounds = array<i64: 64, 16>}, {pipeline_mode = #tpu.pipeline_mode<synchronous>, transform_indices = @transform_2, window_bounds = array<i64: 64, 1>}, {pipeline_mode = #tpu.pipeline_mode<synchronous>, transform_indices = @transform_3, window_bounds = array<i64: 64, 64>}, {pipeline_mode = #tpu.pipeline_mode<synchronous>, transform_indices = @transform_4, window_bounds = array<i64: 64, 1>}, {pipeline_mode = #tpu.pipeline_mode<synchronous>, transform_indices = @transform_5, window_bounds = array<i64: 32, 64>}, {pipeline_mode = #tpu.pipeline_mode<synchronous>, transform_indices = @transform_6, window_bounds = array<i64: 32, 1>}, {pipeline_mode = #tpu.pipeline_mode<synchronous>, transform_indices = @transform_7, window_bounds = array<i64: 32, 1>}, {pipeline_mode = #tpu.pipeline_mode<synchronous>, transform_indices = @transform_8, window_bounds = array<i64: 1, 1>}, {transform_indices = @transform_9, window_bounds = array<i64: 1, 512>}]} {
    %c0 = arith.constant 0 : index
    %c0_0 = arith.constant 0 : index
    %0 = vector.load %arg1[%c0, %c0_0] : memref<512x16xf32, #tpu.memory_space<vmem>>, vector<512x16xf32>
    %c0_1 = arith.constant 0 : index
    %c0_2 = arith.constant 0 : index
    %1 = vector.load %arg2[%c0_1, %c0_2] : memref<64x16xf32, #tpu.memory_space<vmem>>, vector<64x16xf32>
    %cst = arith.constant dense<0.000000e+00> : vector<64x512xf32>
    %2 = tpu.matmul %1, %0, %cst {dimension_numbers = #tpu.dot_dimension_numbers<[1], [1], [0], [0], [0, 0, 1, 0], [], []>} : vector<64x16xf32>, vector<512x16xf32>, vector<64x512xf32> -> vector<64x512xf32>
    %c0_3 = arith.constant 0 : index
    %c0_4 = arith.constant 0 : index
    %3 = vector.load %arg3[%c0_3, %c0_4] : memref<64x1xf32, #tpu.memory_space<vmem>>, vector<64x1xf32>
    %4 = vector.broadcast %3 : vector<64x1xf32> to vector<64x512xf32>
    %5 = arith.addf %2, %4 : vector<64x512xf32>
    %cst_5 = arith.constant 0.000000e+00 : f32
    %6 = vector.broadcast %cst_5 : f32 to vector<64x512xf32>
    %7 = arith.maximumf %5, %6 : vector<64x512xf32>
    %c0_6 = arith.constant 0 : index
    %c0_7 = arith.constant 0 : index
    %8 = vector.load %arg4[%c0_6, %c0_7] : memref<64x64xf32, #tpu.memory_space<vmem>>, vector<64x64xf32>
    %cst_8 = arith.constant dense<0.000000e+00> : vector<64x512xf32>
    %9 = tpu.matmul %8, %7, %cst_8 {dimension_numbers = #tpu.dot_dimension_numbers<[1], [0], [0], [1], [0, 0, 1, 1], [], []>} : vector<64x64xf32>, vector<64x512xf32>, vector<64x512xf32> -> vector<64x512xf32>
    %c0_9 = arith.constant 0 : index
    %c0_10 = arith.constant 0 : index
    %10 = vector.load %arg5[%c0_9, %c0_10] : memref<64x1xf32, #tpu.memory_space<vmem>>, vector<64x1xf32>
    %11 = vector.broadcast %10 : vector<64x1xf32> to vector<64x512xf32>
    %12 = arith.addf %9, %11 : vector<64x512xf32>
    %cst_11 = arith.constant 0.000000e+00 : f32
    %13 = vector.broadcast %cst_11 : f32 to vector<64x512xf32>
    %14 = arith.maximumf %12, %13 : vector<64x512xf32>
    %c0_12 = arith.constant 0 : index
    %c0_13 = arith.constant 0 : index
    %15 = vector.load %arg6[%c0_12, %c0_13] : memref<32x64xf32, #tpu.memory_space<vmem>>, vector<32x64xf32>
    %cst_14 = arith.constant dense<0.000000e+00> : vector<32x512xf32>
    %16 = tpu.matmul %15, %14, %cst_14 {dimension_numbers = #tpu.dot_dimension_numbers<[1], [0], [0], [1], [0, 0, 1, 1], [], []>} : vector<32x64xf32>, vector<64x512xf32>, vector<32x512xf32> -> vector<32x512xf32>
    %c0_15 = arith.constant 0 : index
    %c0_16 = arith.constant 0 : index
    %17 = vector.load %arg7[%c0_15, %c0_16] : memref<32x1xf32, #tpu.memory_space<vmem>>, vector<32x1xf32>
    %18 = vector.broadcast %17 : vector<32x1xf32> to vector<32x512xf32>
    %19 = arith.addf %16, %18 : vector<32x512xf32>
    %cst_17 = arith.constant 0.000000e+00 : f32
    %20 = vector.broadcast %cst_17 : f32 to vector<32x512xf32>
    %21 = arith.maximumf %19, %20 : vector<32x512xf32>
    %c0_18 = arith.constant 0 : index
    %c0_19 = arith.constant 0 : index
    %22 = vector.load %arg8[%c0_18, %c0_19] : memref<32x1xf32, #tpu.memory_space<vmem>>, vector<32x1xf32>
    %23 = vector.broadcast %22 : vector<32x1xf32> to vector<32x512xf32>
    %24 = arith.mulf %21, %23 : vector<32x512xf32>
    %cst_20 = arith.constant dense<0.000000e+00> : vector<512xf32>
    %25 = vector.multi_reduction <add>, %24, %cst_20 [0] : vector<32x512xf32> to vector<512xf32>
    %26 = vector.shape_cast %25 : vector<512xf32> to vector<1x512xf32>
    %c0_21 = arith.constant 0 : index
    %c0_22 = arith.constant 0 : index
    %27 = vector.load %arg9[%c0_21, %c0_22] : memref<1x1xf32, #tpu.memory_space<vmem>>, vector<1x1xf32>
    %28 = vector.broadcast %27 : vector<1x1xf32> to vector<1x512xf32>
    %29 = arith.addf %26, %28 : vector<1x512xf32>
    %cst_23 = arith.constant 0.000000e+00 : f32
    %30 = vector.broadcast %cst_23 : f32 to vector<1x512xf32>
    %31 = arith.subf %30, %29 : vector<1x512xf32>
    %32 = math.exp %31 : vector<1x512xf32>
    %cst_24 = arith.constant 1.000000e+00 : f32
    %33 = vector.broadcast %cst_24 : f32 to vector<1x512xf32>
    %34 = arith.addf %33, %32 : vector<1x512xf32>
    %cst_25 = arith.constant 1.000000e+00 : f32
    %35 = vector.broadcast %cst_25 : f32 to vector<1x512xf32>
    %36 = arith.divf %35, %34 : vector<1x512xf32>
    %c0_26 = arith.constant 0 : index
    %c0_27 = arith.constant 0 : index
    %37 = vector.load %arg10[%c0_26, %c0_27] : memref<1x512xf32, #tpu.memory_space<vmem>>, vector<1x512xf32>
    tpu.vector_store %arg10[%c0_26, %c0_27], %36 {strides = array<i32>} : memref<1x512xf32, #tpu.memory_space<vmem>>, vector<1x512xf32>,
    return
  }
  func.func @transform_0(%arg0: i32) -> (i32, i32) {
    %c0_i32 = arith.constant 0 : i32
    %c0_i32_0 = arith.constant 0 : i32
    return %arg0, %c0_i32 : i32, i32
  }
  func.func @transform_1(%arg0: i32) -> (i32, i32) {
    %c0_i32 = arith.constant 0 : i32
    %c0_i32_0 = arith.constant 0 : i32
    %c0_i32_1 = arith.constant 0 : i32
    return %c0_i32, %c0_i32_0 : i32, i32
  }
  func.func @transform_2(%arg0: i32) -> (i32, i32) {
    %c0_i32 = arith.constant 0 : i32
    %c0_i32_0 = arith.constant 0 : i32
    %c0_i32_1 = arith.constant 0 : i32
    return %c0_i32, %c0_i32_0 : i32, i32
  }
  func.func @transform_3(%arg0: i32) -> (i32, i32) {
    %c0_i32 = arith.constant 0 : i32
    %c0_i32_0 = arith.constant 0 : i32
    %c0_i32_1 = arith.constant 0 : i32
    return %c0_i32, %c0_i32_0 : i32, i32
  }
  func.func @transform_4(%arg0: i32) -> (i32, i32) {
    %c0_i32 = arith.constant 0 : i32
    %c0_i32_0 = arith.constant 0 : i32
    %c0_i32_1 = arith.constant 0 : i32
    return %c0_i32, %c0_i32_0 : i32, i32
  }
  func.func @transform_5(%arg0: i32) -> (i32, i32) {
    %c0_i32 = arith.constant 0 : i32
    %c0_i32_0 = arith.constant 0 : i32
    %c0_i32_1 = arith.constant 0 : i32
    return %c0_i32, %c0_i32_0 : i32, i32
  }
  func.func @transform_6(%arg0: i32) -> (i32, i32) {
    %c0_i32 = arith.constant 0 : i32
    %c0_i32_0 = arith.constant 0 : i32
    %c0_i32_1 = arith.constant 0 : i32
    return %c0_i32, %c0_i32_0 : i32, i32
  }
  func.func @transform_7(%arg0: i32) -> (i32, i32) {
    %c0_i32 = arith.constant 0 : i32
    %c0_i32_0 = arith.constant 0 : i32
    %c0_i32_1 = arith.constant 0 : i32
    return %c0_i32, %c0_i32_0 : i32, i32
  }
  func.func @transform_8(%arg0: i32) -> (i32, i32) {
    %c0_i32 = arith.constant 0 : i32
    %c0_i32_0 = arith.constant 0 : i32
    %c0_i32_1 = arith.constant 0 : i32
    return %c0_i32, %c0_i32_0 : i32, i32
  }
  func.func @transform_9(%arg0: i32) -> (i32, i32) {
    %c0_i32 = arith.constant 0 : i32
    %c0_i32_0 = arith.constant 0 : i32
    return %c0_i32, %arg0 : i32, i32
  }
}

</mosaic_0001>

<llo_original>
// kernel: discriminator_forward.1
$region0: #{discriminator_forward.1}
  #allocation0 [shape = 'u32[]', space=smem, size = 0x4, offset = 0x4, fixed_abs, tag = 'smem constant byte address 0x4 - core index']
  #allocation1 [shape = 'u32[72,128]{1,0:T(1,128)}', space=vmem, size = 0x9000, scoped, tag = 'internal scratch']
  #allocation2 [shape = 'f32[1,1]{1,0:T(1,128)S(1)}', space=vmem, size = 0x200, scoped, tag = 'scoped memory for discriminator_forward.1']
  %s0 = inlined_call_operand.vmem [shape: f32[512,16], index: 0, kind: input, shape index: {}]
  %s1 = inlined_call_operand.vmem [shape: f32[64,16], index: 1, kind: input, shape index: {}]
  %s2 = inlined_call_operand.vmem [shape: f32[64,1], index: 2, kind: input, shape index: {}]
  %s3 = inlined_call_operand.vmem [shape: f32[64,64], index: 3, kind: input, shape index: {}]
  %s4 = inlined_call_operand.vmem [shape: f32[64,1], index: 4, kind: input, shape index: {}]
  %s5 = inlined_call_operand.vmem [shape: f32[32,64], index: 5, kind: input, shape index: {}]
  %s6 = inlined_call_operand.vmem [shape: f32[32,1], index: 6, kind: input, shape index: {}]
  %s7 = inlined_call_operand.vmem [shape: f32[32,1], index: 7, kind: input, shape index: {}]
  %s8 = inlined_call_operand.<no memory space> [shape: f32[1,1], index: 8, kind: input, shape index: {}]
  %s9 = inlined_call_operand.hbm [shape: f32[1,512], index: 9, kind: output, shape index: {}]
  %s10 = sld [smem:[#allocation0]]
  $region46: #{discriminator_forward.1} parent=0
    _
  %s12 = ssub.s32 1, %s10
  %s13 = scalar_select 0, %s12, %s10
  %v14 = vstv %s8
  %15 = vst [vmem:[#allocation2] sm:$0x1] %v14
  $region1: #{discriminator_forward.1} parent=0
    #allocation3 [shape = 'u8[2048]{0}', space=vmem, size = 0x800, scoped, tag = 'output window, operand 0, single buffered']
    #allocation4 [shape = 's32[1]{0}', space=sflag, size = 0x4, scoped, tag = 'scoped memory for discriminator_forward.1']
    %16 = vsyncpa [#allocation4], 0
    // Predicated region
    $region2: #{discriminator_forward.1} parent=1 // pred_check
      _
    $region3: #{discriminator_forward.1} parent=1 // pred_check_branch
      %18 = sbr.rel (0) target = $region5
    $region4: #{discriminator_forward.1} parent=1 // pred_region
      _
    $region5: #{discriminator_forward.1} parent=1 // pred_fallthru
      _
    // Predicated region
    $region6: #{discriminator_forward.1} parent=1 // pred_check
      _
    $region7: #{discriminator_forward.1} parent=1 // pred_check_branch
      %20 = sbr.rel (0) target = $region9
    $region8: #{discriminator_forward.1} parent=1 // pred_region
      _
    $region9: #{discriminator_forward.1} parent=1 // pred_fallthru
      _
    // Predicated region
    $region10: #{discriminator_forward.1} parent=1 // pred_check
      _
    $region11: #{discriminator_forward.1} parent=1 // pred_check_branch
      %22 = sbr.rel (0) target = $region13
    $region12: #{discriminator_forward.1} parent=1 // pred_region
      _
    $region13: #{discriminator_forward.1} parent=1 // pred_fallthru
      _
    // Predicated region
    $region14: #{discriminator_forward.1} parent=1 // pred_check
      _
    $region15: #{discriminator_forward.1} parent=1 // pred_check_branch
      %24 = sbr.rel (0) target = $region17
    $region16: #{discriminator_forward.1} parent=1 // pred_region
      _
    $region17: #{discriminator_forward.1} parent=1 // pred_fallthru
      _
    // Predicated region
    $region18: #{discriminator_forward.1} parent=1 // pred_check
      _
    $region19: #{discriminator_forward.1} parent=1 // pred_check_branch
      %26 = sbr.rel (0) target = $region21
    $region20: #{discriminator_forward.1} parent=1 // pred_region
      _
    $region21: #{discriminator_forward.1} parent=1 // pred_fallthru
      _
    // Predicated region
    $region22: #{discriminator_forward.1} parent=1 // pred_check
      _
    $region23: #{discriminator_forward.1} parent=1 // pred_check_branch
      %28 = sbr.rel (0) target = $region25
    $region24: #{discriminator_forward.1} parent=1 // pred_region
      _
    $region25: #{discriminator_forward.1} parent=1 // pred_fallthru
      _
    // Predicated region
    $region26: #{discriminator_forward.1} parent=1 // pred_check
      _
    $region27: #{discriminator_forward.1} parent=1 // pred_check_branch
      %30 = sbr.rel (0) target = $region29
    $region28: #{discriminator_forward.1} parent=1 // pred_region
      _
    $region29: #{discriminator_forward.1} parent=1 // pred_fallthru
      _
    // Predicated region
    $region30: #{discriminator_forward.1} parent=1 // pred_check
      _
    $region31: #{discriminator_forward.1} parent=1 // pred_check_branch
      %32 = sbr.rel (0) target = $region33
    $region32: #{discriminator_forward.1} parent=1 // pred_region
      _
    $region33: #{discriminator_forward.1} parent=1 // pred_fallthru
      _
    // Predicated region
    $region34: #{discriminator_forward.1} parent=1 // pred_check
      _
    $region35: #{discriminator_forward.1} parent=1 // pred_check_branch
      %34 = sbr.rel (0) target = $region37
    $region36: #{discriminator_forward.1} parent=1 // pred_region
      _
    $region37: #{discriminator_forward.1} parent=1 // pred_fallthru
      _
    %v35 = vld [vmem:[%s0] sm:$0xff]
    %v36 = vld [vmem:[%s0 + $0x8] sm:$0xff]
    %v37 = vld [vmem:[%s0 + $0x10] sm:$0xff]
    %v38 = vld [vmem:[%s0 + $0x18] sm:$0xff]
    %v39 = vld [vmem:[%s0 + $0x20] sm:$0xff]
    %v40 = vld [vmem:[%s0 + $0x28] sm:$0xff]
    %v41 = vld [vmem:[%s0 + $0x30] sm:$0xff]
    %v42 = vld [vmem:[%s0 + $0x38] sm:$0xff]
    %v43 = vld [vmem:[%s0 + $0x40] sm:$0xff]
    %v44 = vld [vmem:[%s0 + $0x48] sm:$0xff]
    %v45 = vld [vmem:[%s0 + $0x50] sm:$0xff]
    %v46 = vld [vmem:[%s0 + $0x58] sm:$0xff]
    %v47 = vld [vmem:[%s0 + $0x60] sm:$0xff]
    %v48 = vld [vmem:[%s0 + $0x68] sm:$0xff]
    %v49 = vld [vmem:[%s0 + $0x70] sm:$0xff]
    %v50 = vld [vmem:[%s0 + $0x78] sm:$0xff]
    %v51 = vld [vmem:[%s0 + $0x80] sm:$0xff]
    %v52 = vld [vmem:[%s0 + $0x88] sm:$0xff]
    %v53 = vld [vmem:[%s0 + $0x90] sm:$0xff]
    %v54 = vld [vmem:[%s0 + $0x98] sm:$0xff]
    %v55 = vld [vmem:[%s0 + $0xa0] sm:$0xff]
    %v56 = vld [vmem:[%s0 + $0xa8] sm:$0xff]
    %v57 = vld [vmem:[%s0 + $0xb0] sm:$0xff]
    %v58 = vld [vmem:[%s0 + $0xb8] sm:$0xff]
    %v59 = vld [vmem:[%s0 + $0xc0] sm:$0xff]
    %v60 = vld [vmem:[%s0 + $0xc8] sm:$0xff]
    %v61 = vld [vmem:[%s0 + $0xd0] sm:$0xff]
    %v62 = vld [vmem:[%s0 + $0xd8] sm:$0xff]
    %v63 = vld [vmem:[%s0 + $0xe0] sm:$0xff]
    %v64 = vld [vmem:[%s0 + $0xe8] sm:$0xff]
    %v65 = vld [vmem:[%s0 + $0xf0] sm:$0xff]
    %v66 = vld [vmem:[%s0 + $0xf8] sm:$0xff]
    %v67 = vld [vmem:[%s0 + $0x100] sm:$0xff]
    %v68 = vld [vmem:[%s0 + $0x108] sm:$0xff]
    %v69 = vld [vmem:[%s0 + $0x110] sm:$0xff]
    %v70 = vld [vmem:[%s0 + $0x118] sm:$0xff]
    %v71 = vld [vmem:[%s0 + $0x120] sm:$0xff]
    %v72 = vld [vmem:[%s0 + $0x128] sm:$0xff]
    %v73 = vld [vmem:[%s0 + $0x130] sm:$0xff]
    %v74 = vld [vmem:[%s0 + $0x138] sm:$0xff]
    %v75 = vld [vmem:[%s0 + $0x140] sm:$0xff]
    %v76 = vld [vmem:[%s0 + $0x148] sm:$0xff]
    %v77 = vld [vmem:[%s0 + $0x150] sm:$0xff]
    %v78 = vld [vmem:[%s0 + $0x158] sm:$0xff]
    %v79 = vld [vmem:[%s0 + $0x160] sm:$0xff]
    %v80 = vld [vmem:[%s0 + $0x168] sm:$0xff]
    %v81 = vld [vmem:[%s0 + $0x170] sm:$0xff]
    %v82 = vld [vmem:[%s0 + $0x178] sm:$0xff]
    %v83 = vld [vmem:[%s0 + $0x180] sm:$0xff]
    %v84 = vld [vmem:[%s0 + $0x188] sm:$0xff]
    %v85 = vld [vmem:[%s0 + $0x190] sm:$0xff]
    %v86 = vld [vmem:[%s0 + $0x198] sm:$0xff]
    %v87 = vld [vmem:[%s0 + $0x1a0] sm:$0xff]
    %v88 = vld [vmem:[%s0 + $0x1a8] sm:$0xff]
    %v89 = vld [vmem:[%s0 + $0x1b0] sm:$0xff]
    %v90 = vld [vmem:[%s0 + $0x1b8] sm:$0xff]
    %v91 = vld [vmem:[%s0 + $0x1c0] sm:$0xff]
    %v92 = vld [vmem:[%s0 + $0x1c8] sm:$0xff]
    %v93 = vld [vmem:[%s0 + $0x1d0] sm:$0xff]
    %v94 = vld [vmem:[%s0 + $0x1d8] sm:$0xff]
    %v95 = vld [vmem:[%s0 + $0x1e0] sm:$0xff]
    %v96 = vld [vmem:[%s0 + $0x1e8] sm:$0xff]
    %v97 = vld [vmem:[%s0 + $0x1f0] sm:$0xff]
    %v98 = vld [vmem:[%s0 + $0x1f8] sm:$0xff]
    %v99 = vld [vmem:[%s1] sm:$0xff]
    %v100 = vld [vmem:[%s1 + $0x8] sm:$0xff]
    %v101 = vld [vmem:[%s1 + $0x10] sm:$0xff]
    %v102 = vld [vmem:[%s1 + $0x18] sm:$0xff]
    %v103 = vld [vmem:[%s1 + $0x20] sm:$0xff]
    %v104 = vld [vmem:[%s1 + $0x28] sm:$0xff]
    %v105 = vld [vmem:[%s1 + $0x30] sm:$0xff]
    %v106 = vld [vmem:[%s1 + $0x38] sm:$0xff]
    %v107 = vld [vmem:[%s2] sm:$0xff]
    %v108 = vld [vmem:[%s2 + $0x8] sm:$0xff]
    %v109 = vld [vmem:[%s2 + $0x10] sm:$0xff]
    %v110 = vld [vmem:[%s2 + $0x18] sm:$0xff]
    %v111 = vld [vmem:[%s2 + $0x20] sm:$0xff]
    %v112 = vld [vmem:[%s2 + $0x28] sm:$0xff]
    %v113 = vld [vmem:[%s2 + $0x30] sm:$0xff]
    %v114 = vld [vmem:[%s2 + $0x38] sm:$0xff]
    %116 = vset.pattern.permute.xlu0 0
    %117 = vperm.xlu0 %116, %v107
    %v118 = vpop.permute.xlu0 %117
    %121 = vset.pattern.permute.xlu0 0
    %122 = vperm.xlu0 %121, %v108
    %v123 = vpop.permute.xlu0 %122
    %126 = vset.pattern.permute.xlu0 0
    %127 = vperm.xlu0 %126, %v109
    %v128 = vpop.permute.xlu0 %127
    %131 = vset.pattern.permute.xlu0 0
    %132 = vperm.xlu0 %131, %v110
    %v133 = vpop.permute.xlu0 %132
    %136 = vset.pattern.permute.xlu0 0
    %137 = vperm.xlu0 %136, %v111
    %v138 = vpop.permute.xlu0 %137
    %141 = vset.pattern.permute.xlu0 0
    %142 = vperm.xlu0 %141, %v112
    %v143 = vpop.permute.xlu0 %142
    %146 = vset.pattern.permute.xlu0 0
    %147 = vperm.xlu0 %146, %v113
    %v148 = vpop.permute.xlu0 %147
    %151 = vset.pattern.permute.xlu0 0
    %152 = vperm.xlu0 %151, %v114
    %v153 = vpop.permute.xlu0 %152
    %vm155 = vcmask 130048
    %v157 = vsel %vm155, %v99, 0
    %v160 = vsel %vm155, %v100, 0
    %v163 = vsel %vm155, %v101, 0
    %v166 = vsel %vm155, %v102, 0
    %v169 = vsel %vm155, %v103, 0
    %v172 = vsel %vm155, %v104, 0
    %v175 = vsel %vm155, %v105, 0
    %v178 = vsel %vm155, %v106, 0
    %v181 = vsel %vm155, %v35, 0
    %v184 = vsel %vm155, %v36, 0
    %v187 = vsel %vm155, %v37, 0
    %v190 = vsel %vm155, %v38, 0
    %v193 = vsel %vm155, %v39, 0
    %v196 = vsel %vm155, %v40, 0
    %v199 = vsel %vm155, %v41, 0
    %v202 = vsel %vm155, %v42, 0
    %v205 = vsel %vm155, %v43, 0
    %v208 = vsel %vm155, %v44, 0
    %v211 = vsel %vm155, %v45, 0
    %v214 = vsel %vm155, %v46, 0
    %v217 = vsel %vm155, %v47, 0
    %v220 = vsel %vm155, %v48, 0
    %v223 = vsel %vm155, %v49, 0
    %v226 = vsel %vm155, %v50, 0
    %v229 = vsel %vm155, %v51, 0
    %v232 = vsel %vm155, %v52, 0
    %v235 = vsel %vm155, %v53, 0
    %v238 = vsel %vm155, %v54, 0
    %v241 = vsel %vm155, %v55, 0
    %v244 = vsel %vm155, %v56, 0
    %v247 = vsel %vm155, %v57, 0
    %v250 = vsel %vm155, %v58, 0
    %v253 = vsel %vm155, %v59, 0
    %v256 = vsel %vm155, %v60, 0
    %v259 = vsel %vm155, %v61, 0
    %v262 = vsel %vm155, %v62, 0
    %v265 = vsel %vm155, %v63, 0
    %v268 = vsel %vm155, %v64, 0
    %v271 = vsel %vm155, %v65, 0
    %v274 = vsel %vm155, %v66, 0
    %v277 = vsel %vm155, %v67, 0
    %v280 = vsel %vm155, %v68, 0
    %v283 = vsel %vm155, %v69, 0
    %v286 = vsel %vm155, %v70, 0
    %v289 = vsel %vm155, %v71, 0
    %v292 = vsel %vm155, %v72, 0
    %v295 = vsel %vm155, %v73, 0
    %v298 = vsel %vm155, %v74, 0
    %v301 = vsel %vm155, %v75, 0
    %v304 = vsel %vm155, %v76, 0
    %v307 = vsel %vm155, %v77, 0
    %v310 = vsel %vm155, %v78, 0
    %v313 = vsel %vm155, %v79, 0
    %v316 = vsel %vm155, %v80, 0
    %v319 = vsel %vm155, %v81, 0
    %v322 = vsel %vm155, %v82, 0
    %v325 = vsel %vm155, %v83, 0
    %v328 = vsel %vm155, %v84, 0
    %v331 = vsel %vm155, %v85, 0
    %v334 = vsel %vm155, %v86, 0
    %v337 = vsel %vm155, %v87, 0
    %v340 = vsel %vm155, %v88, 0
    %v343 = vsel %vm155, %v89, 0
    %v346 = vsel %vm155, %v90, 0
    %v349 = vsel %vm155, %v91, 0
    %v352 = vsel %vm155, %v92, 0
    %v355 = vsel %vm155, %v93, 0
    %v358 = vsel %vm155, %v94, 0
    %v361 = vsel %vm155, %v95, 0
    %v364 = vsel %vm155, %v96, 0
    %v367 = vsel %vm155, %v97, 0
    %v370 = vsel %vm155, %v98, 0
    %372 = vmatpush.xpose.msra.mxu0 %v226
    %373 = vmatpush.xpose.msra.mxu0 %v223
    %374 = vmatpush.xpose.msra.mxu0 %v220
    %375 = vmatpush.xpose.msra.mxu0 %v217
    %376 = vmatpush.xpose.msra.mxu0 %v214
    %377 = vmatpush.xpose.msra.mxu0 %v211
    %378 = vmatpush.xpose.msra.mxu0 %v208
    %379 = vmatpush.xpose.msra.mxu0 %v205
    %380 = vmatpush.xpose.msra.mxu0 %v202
    %381 = vmatpush.xpose.msra.mxu0 %v199
    %382 = vmatpush.xpose.msra.mxu0 %v196
    %383 = vmatpush.xpose.msra.mxu0 %v193
    %384 = vmatpush.xpose.msra.mxu0 %v190
    %385 = vmatpush.xpose.msra.mxu0 %v187
    %386 = vmatpush.xpose.msra.mxu0 %v184
    %387 = vmatpush.xpose.msra.mxu0 %v181
    %388 = vmatmul.f32.gmra.mxu0 %v157
    %v389 = vpop.f32.mrf.mxu0
    %v390 = vadd.f32 %v118, %v389
    %391 = vmatmul.f32.gmra.mxu0 %v160
    %v392 = vpop.f32.mrf.mxu0
    %v393 = vadd.f32 %v123, %v392
    %394 = vmatmul.f32.gmra.mxu0 %v163
    %v395 = vpop.f32.mrf.mxu0
    %v396 = vadd.f32 %v128, %v395
    %397 = vmatmul.f32.gmra.mxu0 %v166
    %v398 = vpop.f32.mrf.mxu0
    %v399 = vadd.f32 %v133, %v398
    %400 = vmatmul.f32.gmra.mxu0 %v169
    %v401 = vpop.f32.mrf.mxu0
    %v402 = vadd.f32 %v138, %v401
    %403 = vmatmul.f32.gmra.mxu0 %v172
    %v404 = vpop.f32.mrf.mxu0
    %v405 = vadd.f32 %v143, %v404
    %406 = vmatmul.f32.gmra.mxu0 %v175
    %v407 = vpop.f32.mrf.mxu0
    %v408 = vadd.f32 %v148, %v407
    %409 = vmatmul.f32.gmra.mxu0 %v178
    %v410 = vpop.f32.mrf.mxu0
    %v411 = vadd.f32 %v153, %v410
    %412 = vdwg.mxu0
    %413 = vmatpush.xpose.msra.mxu0 %v274
    %414 = vmatpush.xpose.msra.mxu0 %v271
    %415 = vmatpush.xpose.msra.mxu0 %v268
    %416 = vmatpush.xpose.msra.mxu0 %v265
    %417 = vmatpush.xpose.msra.mxu0 %v262
    %418 = vmatpush.xpose.msra.mxu0 %v259
    %419 = vmatpush.xpose.msra.mxu0 %v256
    %420 = vmatpush.xpose.msra.mxu0 %v253
    %421 = vmatpush.xpose.msra.mxu0 %v250
    %422 = vmatpush.xpose.msra.mxu0 %v247
    %423 = vmatpush.xpose.msra.mxu0 %v244
    %424 = vmatpush.xpose.msra.mxu0 %v241
    %425 = vmatpush.xpose.msra.mxu0 %v238
    %426 = vmatpush.xpose.msra.mxu0 %v235
    %427 = vmatpush.xpose.msra.mxu0 %v232
    %428 = vmatpush.xpose.msra.mxu0 %v229
    %429 = vmatmul.f32.gmra.mxu0 %v157
    %v430 = vpop.f32.mrf.mxu0
    %v431 = vadd.f32 %v118, %v430
    %432 = vmatmul.f32.gmra.mxu0 %v160
    %v433 = vpop.f32.mrf.mxu0
    %v434 = vadd.f32 %v123, %v433
    %435 = vmatmul.f32.gmra.mxu0 %v163
    %v436 = vpop.f32.mrf.mxu0
    %v437 = vadd.f32 %v128, %v436
    %438 = vmatmul.f32.gmra.mxu0 %v166
    %v439 = vpop.f32.mrf.mxu0
    %v440 = vadd.f32 %v133, %v439
    %441 = vmatmul.f32.gmra.mxu0 %v169
    %v442 = vpop.f32.mrf.mxu0
    %v443 = vadd.f32 %v138, %v442
    %444 = vmatmul.f32.gmra.mxu0 %v172
    %v445 = vpop.f32.mrf.mxu0
    %v446 = vadd.f32 %v143, %v445
    %447 = vmatmul.f32.gmra.mxu0 %v175
    %v448 = vpop.f32.mrf.mxu0
    %v449 = vadd.f32 %v148, %v448
    %450 = vmatmul.f32.gmra.mxu0 %v178
    %v451 = vpop.f32.mrf.mxu0
    %v452 = vadd.f32 %v153, %v451
    %453 = vdwg.mxu0
    %454 = vmatpush.xpose.msra.mxu0 %v322
    %455 = vmatpush.xpose.msra.mxu0 %v319
    %456 = vmatpush.xpose.msra.mxu0 %v316
    %457 = vmatpush.xpose.msra.mxu0 %v313
    %458 = vmatpush.xpose.msra.mxu0 %v310
    %459 = vmatpush.xpose.msra.mxu0 %v307
    %460 = vmatpush.xpose.msra.mxu0 %v304
    %461 = vmatpush.xpose.msra.mxu0 %v301
    %462 = vmatpush.xpose.msra.mxu0 %v298
    %463 = vmatpush.xpose.msra.mxu0 %v295
    %464 = vmatpush.xpose.msra.mxu0 %v292
    %465 = vmatpush.xpose.msra.mxu0 %v289
    %466 = vmatpush.xpose.msra.mxu0 %v286
    %467 = vmatpush.xpose.msra.mxu0 %v283
    %468 = vmatpush.xpose.msra.mxu0 %v280
    %469 = vmatpush.xpose.msra.mxu0 %v277
    %470 = vmatmul.f32.gmra.mxu0 %v157
    %v471 = vpop.f32.mrf.mxu0
    %v472 = vadd.f32 %v118, %v471
    %473 = vmatmul.f32.gmra.mxu0 %v160
    %v474 = vpop.f32.mrf.mxu0
    %v475 = vadd.f32 %v123, %v474
    %476 = vmatmul.f32.gmra.mxu0 %v163
    %v477 = vpop.f32.mrf.mxu0
    %v478 = vadd.f32 %v128, %v477
    %479 = vmatmul.f32.gmra.mxu0 %v166
    %v480 = vpop.f32.mrf.mxu0
    %v481 = vadd.f32 %v133, %v480
    %482 = vmatmul.f32.gmra.mxu0 %v169
    %v483 = vpop.f32.mrf.mxu0
    %v484 = vadd.f32 %v138, %v483
    %485 = vmatmul.f32.gmra.mxu0 %v172
    %v486 = vpop.f32.mrf.mxu0
    %v487 = vadd.f32 %v143, %v486
    %488 = vmatmul.f32.gmra.mxu0 %v175
    %v489 = vpop.f32.mrf.mxu0
    %v490 = vadd.f32 %v148, %v489
    %491 = vmatmul.f32.gmra.mxu0 %v178
    %v492 = vpop.f32.mrf.mxu0
    %v493 = vadd.f32 %v153, %v492
    %494 = vdwg.mxu0
    %495 = vmatpush.xpose.msra.mxu0 %v370
    %496 = vmatpush.xpose.msra.mxu0 %v367
    %497 = vmatpush.xpose.msra.mxu0 %v364
    %498 = vmatpush.xpose.msra.mxu0 %v361
    %499 = vmatpush.xpose.msra.mxu0 %v358
    %500 = vmatpush.xpose.msra.mxu0 %v355
    %501 = vmatpush.xpose.msra.mxu0 %v352
    %502 = vmatpush.xpose.msra.mxu0 %v349
    %503 = vmatpush.xpose.msra.mxu0 %v346
    %504 = vmatpush.xpose.msra.mxu0 %v343
    %505 = vmatpush.xpose.msra.mxu0 %v340
    %506 = vmatpush.xpose.msra.mxu0 %v337
    %507 = vmatpush.xpose.msra.mxu0 %v334
    %508 = vmatpush.xpose.msra.mxu0 %v331
    %509 = vmatpush.xpose.msra.mxu0 %v328
    %510 = vmatpush.xpose.msra.mxu0 %v325
    %511 = vmatmul.f32.gmra.mxu0 %v157
    %v512 = vpop.f32.mrf.mxu0
    %v513 = vadd.f32 %v118, %v512
    %514 = vmatmul.f32.gmra.mxu0 %v160
    %v515 = vpop.f32.mrf.mxu0
    %v516 = vadd.f32 %v123, %v515
    %517 = vmatmul.f32.gmra.mxu0 %v163
    %v518 = vpop.f32.mrf.mxu0
    %v519 = vadd.f32 %v128, %v518
    %520 = vmatmul.f32.gmra.mxu0 %v166
    %v521 = vpop.f32.mrf.mxu0
    %v522 = vadd.f32 %v133, %v521
    %523 = vmatmul.f32.gmra.mxu0 %v169
    %v524 = vpop.f32.mrf.mxu0
    %v525 = vadd.f32 %v138, %v524
    %526 = vmatmul.f32.gmra.mxu0 %v172
    %v527 = vpop.f32.mrf.mxu0
    %v528 = vadd.f32 %v143, %v527
    %529 = vmatmul.f32.gmra.mxu0 %v175
    %v530 = vpop.f32.mrf.mxu0
    %v531 = vadd.f32 %v148, %v530
    %532 = vmatmul.f32.gmra.mxu0 %v178
    %v533 = vpop.f32.mrf.mxu0
    %v534 = vadd.f32 %v153, %v533
    %535 = vdwg.mxu0
    %v536 = vmax.f32 %v390, 0.0
    %v537 = vmax.f32 %v431, 0.0
    %v538 = vmax.f32 %v472, 0.0
    %v539 = vmax.f32 %v513, 0.0
    %v540 = vmax.f32 %v393, 0.0
    %v541 = vmax.f32 %v434, 0.0
    %v542 = vmax.f32 %v475, 0.0
    %v543 = vmax.f32 %v516, 0.0
    %v544 = vmax.f32 %v396, 0.0
    %v545 = vmax.f32 %v437, 0.0
    %v546 = vmax.f32 %v478, 0.0
    %v547 = vmax.f32 %v519, 0.0
    %v548 = vmax.f32 %v399, 0.0
    %v549 = vmax.f32 %v440, 0.0
    %v550 = vmax.f32 %v481, 0.0
    %v551 = vmax.f32 %v522, 0.0
    %v552 = vmax.f32 %v402, 0.0
    %v553 = vmax.f32 %v443, 0.0
    %v554 = vmax.f32 %v484, 0.0
    %v555 = vmax.f32 %v525, 0.0
    %v556 = vmax.f32 %v405, 0.0
    %v557 = vmax.f32 %v446, 0.0
    %v558 = vmax.f32 %v487, 0.0
    %v559 = vmax.f32 %v528, 0.0
    %v560 = vmax.f32 %v408, 0.0
    %v561 = vmax.f32 %v449, 0.0
    %v562 = vmax.f32 %v490, 0.0
    %v563 = vmax.f32 %v531, 0.0
    %v564 = vmax.f32 %v411, 0.0
    %v565 = vmax.f32 %v452, 0.0
    %v566 = vmax.f32 %v493, 0.0
    %v567 = vmax.f32 %v534, 0.0
    %v568 = vld [vmem:[%s3] sm:$0xff]
    %v569 = vld [vmem:[%s3 + $0x8] sm:$0xff]
    %v570 = vld [vmem:[%s3 + $0x10] sm:$0xff]
    %v571 = vld [vmem:[%s3 + $0x18] sm:$0xff]
    %v572 = vld [vmem:[%s3 + $0x20] sm:$0xff]
    %v573 = vld [vmem:[%s3 + $0x28] sm:$0xff]
    %v574 = vld [vmem:[%s3 + $0x30] sm:$0xff]
    %v575 = vld [vmem:[%s3 + $0x38] sm:$0xff]
    %v576 = vld [vmem:[%s4] sm:$0xff]
    %v577 = vld [vmem:[%s4 + $0x8] sm:$0xff]
    %v578 = vld [vmem:[%s4 + $0x10] sm:$0xff]
    %v579 = vld [vmem:[%s4 + $0x18] sm:$0xff]
    %v580 = vld [vmem:[%s4 + $0x20] sm:$0xff]
    %v581 = vld [vmem:[%s4 + $0x28] sm:$0xff]
    %v582 = vld [vmem:[%s4 + $0x30] sm:$0xff]
    %v583 = vld [vmem:[%s4 + $0x38] sm:$0xff]
    %585 = vset.pattern.permute.xlu0 0
    %586 = vperm.xlu0 %585, %v576
    %v587 = vpop.permute.xlu0 %586
    %590 = vset.pattern.permute.xlu0 0
    %591 = vperm.xlu0 %590, %v577
    %v592 = vpop.permute.xlu0 %591
    %595 = vset.pattern.permute.xlu0 0
    %596 = vperm.xlu0 %595, %v578
    %v597 = vpop.permute.xlu0 %596
    %600 = vset.pattern.permute.xlu0 0
    %601 = vperm.xlu0 %600, %v579
    %v602 = vpop.permute.xlu0 %601
    %605 = vset.pattern.permute.xlu0 0
    %606 = vperm.xlu0 %605, %v580
    %v607 = vpop.permute.xlu0 %606
    %610 = vset.pattern.permute.xlu0 0
    %611 = vperm.xlu0 %610, %v581
    %v612 = vpop.permute.xlu0 %611
    %615 = vset.pattern.permute.xlu0 0
    %616 = vperm.xlu0 %615, %v582
    %v617 = vpop.permute.xlu0 %616
    %620 = vset.pattern.permute.xlu0 0
    %621 = vperm.xlu0 %620, %v583
    %v622 = vpop.permute.xlu0 %621
    %vm624 = vcmask 523264
    %v626 = vsel %vm624, %v568, 0
    %v629 = vsel %vm624, %v569, 0
    %v632 = vsel %vm624, %v570, 0
    %v635 = vsel %vm624, %v571, 0
    %v638 = vsel %vm624, %v572, 0
    %v641 = vsel %vm624, %v573, 0
    %v644 = vsel %vm624, %v574, 0
    %v647 = vsel %vm624, %v575, 0
    %649 = vmatpush.msra.mxu0 0.0
    %650 = vmatpush.msra.mxu0 0.0
    %651 = vmatpush.msra.mxu0 0.0
    %652 = vmatpush.msra.mxu0 0.0
    %653 = vmatpush.msra.mxu0 0.0
    %654 = vmatpush.msra.mxu0 0.0
    %655 = vmatpush.msra.mxu0 0.0
    %656 = vmatpush.msra.mxu0 0.0
    %657 = vmatpush.msra.mxu0 %v564
    %658 = vmatpush.msra.mxu0 %v560
    %659 = vmatpush.msra.mxu0 %v556
    %660 = vmatpush.msra.mxu0 %v552
    %661 = vmatpush.msra.mxu0 %v548
    %662 = vmatpush.msra.mxu0 %v544
    %663 = vmatpush.msra.mxu0 %v540
    %664 = vmatpush.msra.mxu0 %v536
    %665 = vmatmul.f32.gmra.mxu0 %v626
    %v666 = vpop.f32.mrf.mxu0
    %v667 = vadd.f32 %v587, %v666
    %668 = vmatmul.f32.gmra.mxu0 %v629
    %v669 = vpop.f32.mrf.mxu0
    %v670 = vadd.f32 %v592, %v669
    %671 = vmatmul.f32.gmra.mxu0 %v632
    %v672 = vpop.f32.mrf.mxu0
    %v673 = vadd.f32 %v597, %v672
    %674 = vmatmul.f32.gmra.mxu0 %v635
    %v675 = vpop.f32.mrf.mxu0
    %v676 = vadd.f32 %v602, %v675
    %677 = vmatmul.f32.gmra.mxu0 %v638
    %v678 = vpop.f32.mrf.mxu0
    %v679 = vadd.f32 %v607, %v678
    %680 = vmatmul.f32.gmra.mxu0 %v641
    %v681 = vpop.f32.mrf.mxu0
    %v682 = vadd.f32 %v612, %v681
    %683 = vmatmul.f32.gmra.mxu0 %v644
    %v684 = vpop.f32.mrf.mxu0
    %v685 = vadd.f32 %v617, %v684
    %686 = vmatmul.f32.gmra.mxu0 %v647
    %v687 = vpop.f32.mrf.mxu0
    %v688 = vadd.f32 %v622, %v687
    %689 = vdwg.mxu0
    %690 = vmatpush.msra.mxu0 0.0
    %691 = vmatpush.msra.mxu0 0.0
    %692 = vmatpush.msra.mxu0 0.0
    %693 = vmatpush.msra.mxu0 0.0
    %694 = vmatpush.msra.mxu0 0.0
    %695 = vmatpush.msra.mxu0 0.0
    %696 = vmatpush.msra.mxu0 0.0
    %697 = vmatpush.msra.mxu0 0.0
    %698 = vmatpush.msra.mxu0 %v565
    %699 = vmatpush.msra.mxu0 %v561
    %700 = vmatpush.msra.mxu0 %v557
    %701 = vmatpush.msra.mxu0 %v553
    %702 = vmatpush.msra.mxu0 %v549
    %703 = vmatpush.msra.mxu0 %v545
    %704 = vmatpush.msra.mxu0 %v541
    %705 = vmatpush.msra.mxu0 %v537
    %706 = vmatmul.f32.gmra.mxu0 %v626
    %v707 = vpop.f32.mrf.mxu0
    %v708 = vadd.f32 %v587, %v707
    %709 = vmatmul.f32.gmra.mxu0 %v629
    %v710 = vpop.f32.mrf.mxu0
    %v711 = vadd.f32 %v592, %v710
    %712 = vmatmul.f32.gmra.mxu0 %v632
    %v713 = vpop.f32.mrf.mxu0
    %v714 = vadd.f32 %v597, %v713
    %715 = vmatmul.f32.gmra.mxu0 %v635
    %v716 = vpop.f32.mrf.mxu0
    %v717 = vadd.f32 %v602, %v716
    %718 = vmatmul.f32.gmra.mxu0 %v638
    %v719 = vpop.f32.mrf.mxu0
    %v720 = vadd.f32 %v607, %v719
    %721 = vmatmul.f32.gmra.mxu0 %v641
    %v722 = vpop.f32.mrf.mxu0
    %v723 = vadd.f32 %v612, %v722
    %724 = vmatmul.f32.gmra.mxu0 %v644
    %v725 = vpop.f32.mrf.mxu0
    %v726 = vadd.f32 %v617, %v725
    %727 = vmatmul.f32.gmra.mxu0 %v647
    %v728 = vpop.f32.mrf.mxu0
    %v729 = vadd.f32 %v622, %v728
    %730 = vdwg.mxu0
    %731 = vmatpush.msra.mxu0 0.0
    %732 = vmatpush.msra.mxu0 0.0
    %733 = vmatpush.msra.mxu0 0.0
    %734 = vmatpush.msra.mxu0 0.0
    %735 = vmatpush.msra.mxu0 0.0
    %736 = vmatpush.msra.mxu0 0.0
    %737 = vmatpush.msra.mxu0 0.0
    %738 = vmatpush.msra.mxu0 0.0
    %739 = vmatpush.msra.mxu0 %v566
    %740 = vmatpush.msra.mxu0 %v562
    %741 = vmatpush.msra.mxu0 %v558
    %742 = vmatpush.msra.mxu0 %v554
    %743 = vmatpush.msra.mxu0 %v550
    %744 = vmatpush.msra.mxu0 %v546
    %745 = vmatpush.msra.mxu0 %v542
    %746 = vmatpush.msra.mxu0 %v538
    %747 = vmatmul.f32.gmra.mxu0 %v626
    %v748 = vpop.f32.mrf.mxu0
    %v749 = vadd.f32 %v587, %v748
    %750 = vmatmul.f32.gmra.mxu0 %v629
    %v751 = vpop.f32.mrf.mxu0
    %v752 = vadd.f32 %v592, %v751
    %753 = vmatmul.f32.gmra.mxu0 %v632
    %v754 = vpop.f32.mrf.mxu0
    %v755 = vadd.f32 %v597, %v754
    %756 = vmatmul.f32.gmra.mxu0 %v635
    %v757 = vpop.f32.mrf.mxu0
    %v758 = vadd.f32 %v602, %v757
    %759 = vmatmul.f32.gmra.mxu0 %v638
    %v760 = vpop.f32.mrf.mxu0
    %v761 = vadd.f32 %v607, %v760
    %762 = vmatmul.f32.gmra.mxu0 %v641
    %v763 = vpop.f32.mrf.mxu0
    %v764 = vadd.f32 %v612, %v763
    %765 = vmatmul.f32.gmra.mxu0 %v644
    %v766 = vpop.f32.mrf.mxu0
    %v767 = vadd.f32 %v617, %v766
    %768 = vmatmul.f32.gmra.mxu0 %v647
    %v769 = vpop.f32.mrf.mxu0
    %v770 = vadd.f32 %v622, %v769
    %771 = vdwg.mxu0
    %772 = vmatpush.msra.mxu0 0.0
    %773 = vmatpush.msra.mxu0 0.0
    %774 = vmatpush.msra.mxu0 0.0
    %775 = vmatpush.msra.mxu0 0.0
    %776 = vmatpush.msra.mxu0 0.0
    %777 = vmatpush.msra.mxu0 0.0
    %778 = vmatpush.msra.mxu0 0.0
    %779 = vmatpush.msra.mxu0 0.0
    %780 = vmatpush.msra.mxu0 %v567
    %781 = vmatpush.msra.mxu0 %v563
    %782 = vmatpush.msra.mxu0 %v559
    %783 = vmatpush.msra.mxu0 %v555
    %784 = vmatpush.msra.mxu0 %v551
    %785 = vmatpush.msra.mxu0 %v547
    %786 = vmatpush.msra.mxu0 %v543
    %787 = vmatpush.msra.mxu0 %v539
    %788 = vmatmul.f32.gmra.mxu0 %v626
    %v789 = vpop.f32.mrf.mxu0
    %v790 = vadd.f32 %v587, %v789
    %791 = vmatmul.f32.gmra.mxu0 %v629
    %v792 = vpop.f32.mrf.mxu0
    %v793 = vadd.f32 %v592, %v792
    %794 = vmatmul.f32.gmra.mxu0 %v632
    %v795 = vpop.f32.mrf.mxu0
    %v796 = vadd.f32 %v597, %v795
    %797 = vmatmul.f32.gmra.mxu0 %v635
    %v798 = vpop.f32.mrf.mxu0
    %v799 = vadd.f32 %v602, %v798
    %800 = vmatmul.f32.gmra.mxu0 %v638
    %v801 = vpop.f32.mrf.mxu0
    %v802 = vadd.f32 %v607, %v801
    %803 = vmatmul.f32.gmra.mxu0 %v641
    %v804 = vpop.f32.mrf.mxu0
    %v805 = vadd.f32 %v612, %v804
    %806 = vmatmul.f32.gmra.mxu0 %v644
    %v807 = vpop.f32.mrf.mxu0
    %v808 = vadd.f32 %v617, %v807
    %809 = vmatmul.f32.gmra.mxu0 %v647
    %v810 = vpop.f32.mrf.mxu0
    %v811 = vadd.f32 %v622, %v810
    %812 = vdwg.mxu0
    %v813 = vmax.f32 %v667, 0.0
    %v814 = vmax.f32 %v708, 0.0
    %v815 = vmax.f32 %v749, 0.0
    %v816 = vmax.f32 %v790, 0.0
    %v817 = vmax.f32 %v670, 0.0
    %v818 = vmax.f32 %v711, 0.0
    %v819 = vmax.f32 %v752, 0.0
    %v820 = vmax.f32 %v793, 0.0
    %v821 = vmax.f32 %v673, 0.0
    %v822 = vmax.f32 %v714, 0.0
    %v823 = vmax.f32 %v755, 0.0
    %v824 = vmax.f32 %v796, 0.0
    %v825 = vmax.f32 %v676, 0.0
    %v826 = vmax.f32 %v717, 0.0
    %v827 = vmax.f32 %v758, 0.0
    %v828 = vmax.f32 %v799, 0.0
    %v829 = vmax.f32 %v679, 0.0
    %v830 = vmax.f32 %v720, 0.0
    %v831 = vmax.f32 %v761, 0.0
    %v832 = vmax.f32 %v802, 0.0
    %v833 = vmax.f32 %v682, 0.0
    %v834 = vmax.f32 %v723, 0.0
    %v835 = vmax.f32 %v764, 0.0
    %v836 = vmax.f32 %v805, 0.0
    %v837 = vmax.f32 %v685, 0.0
    %v838 = vmax.f32 %v726, 0.0
    %v839 = vmax.f32 %v767, 0.0
    %v840 = vmax.f32 %v808, 0.0
    %v841 = vmax.f32 %v688, 0.0
    %v842 = vmax.f32 %v729, 0.0
    %v843 = vmax.f32 %v770, 0.0
    %v844 = vmax.f32 %v811, 0.0
    %v845 = vld [vmem:[%s5] sm:$0xff]
    %v846 = vld [vmem:[%s5 + $0x8] sm:$0xff]
    %v847 = vld [vmem:[%s5 + $0x10] sm:$0xff]
    %v848 = vld [vmem:[%s5 + $0x18] sm:$0xff]
    %v849 = vld [vmem:[%s6] sm:$0xff]
    %v850 = vld [vmem:[%s6 + $0x8] sm:$0xff]
    %v851 = vld [vmem:[%s6 + $0x10] sm:$0xff]
    %v852 = vld [vmem:[%s6 + $0x18] sm:$0xff]
    %854 = vset.pattern.permute.xlu0 0
    %855 = vperm.xlu0 %854, %v849
    %v856 = vpop.permute.xlu0 %855
    %859 = vset.pattern.permute.xlu0 0
    %860 = vperm.xlu0 %859, %v850
    %v861 = vpop.permute.xlu0 %860
    %864 = vset.pattern.permute.xlu0 0
    %865 = vperm.xlu0 %864, %v851
    %v866 = vpop.permute.xlu0 %865
    %869 = vset.pattern.permute.xlu0 0
    %870 = vperm.xlu0 %869, %v852
    %v871 = vpop.permute.xlu0 %870
    %v874 = vsel %vm624, %v845, 0
    %v877 = vsel %vm624, %v846, 0
    %v880 = vsel %vm624, %v847, 0
    %v883 = vsel %vm624, %v848, 0
    %885 = vmatpush.msra.mxu0 0.0
    %886 = vmatpush.msra.mxu0 0.0
    %887 = vmatpush.msra.mxu0 0.0
    %888 = vmatpush.msra.mxu0 0.0
    %889 = vmatpush.msra.mxu0 0.0
    %890 = vmatpush.msra.mxu0 0.0
    %891 = vmatpush.msra.mxu0 0.0
    %892 = vmatpush.msra.mxu0 0.0
    %893 = vmatpush.msra.mxu0 %v841
    %894 = vmatpush.msra.mxu0 %v837
    %895 = vmatpush.msra.mxu0 %v833
    %896 = vmatpush.msra.mxu0 %v829
    %897 = vmatpush.msra.mxu0 %v825
    %898 = vmatpush.msra.mxu0 %v821
    %899 = vmatpush.msra.mxu0 %v817
    %900 = vmatpush.msra.mxu0 %v813
    %901 = vmatmul.f32.gmra.mxu0 %v874
    %v902 = vpop.f32.mrf.mxu0
    %v903 = vadd.f32 %v856, %v902
    %904 = vmatmul.f32.gmra.mxu0 %v877
    %v905 = vpop.f32.mrf.mxu0
    %v906 = vadd.f32 %v861, %v905
    %907 = vmatmul.f32.gmra.mxu0 %v880
    %v908 = vpop.f32.mrf.mxu0
    %v909 = vadd.f32 %v866, %v908
    %910 = vmatmul.f32.gmra.mxu0 %v883
    %v911 = vpop.f32.mrf.mxu0
    %v912 = vadd.f32 %v871, %v911
    %913 = vdwg.mxu0
    %914 = vmatpush.msra.mxu0 0.0
    %915 = vmatpush.msra.mxu0 0.0
    %916 = vmatpush.msra.mxu0 0.0
    %917 = vmatpush.msra.mxu0 0.0
    %918 = vmatpush.msra.mxu0 0.0
    %919 = vmatpush.msra.mxu0 0.0
    %920 = vmatpush.msra.mxu0 0.0
    %921 = vmatpush.msra.mxu0 0.0
    %922 = vmatpush.msra.mxu0 %v842
    %923 = vmatpush.msra.mxu0 %v838
    %924 = vmatpush.msra.mxu0 %v834
    %925 = vmatpush.msra.mxu0 %v830
    %926 = vmatpush.msra.mxu0 %v826
    %927 = vmatpush.msra.mxu0 %v822
    %928 = vmatpush.msra.mxu0 %v818
    %929 = vmatpush.msra.mxu0 %v814
    %930 = vmatmul.f32.gmra.mxu0 %v874
    %v931 = vpop.f32.mrf.mxu0
    %v932 = vadd.f32 %v856, %v931
    %933 = vmatmul.f32.gmra.mxu0 %v877
    %v934 = vpop.f32.mrf.mxu0
    %v935 = vadd.f32 %v861, %v934
    %936 = vmatmul.f32.gmra.mxu0 %v880
    %v937 = vpop.f32.mrf.mxu0
    %v938 = vadd.f32 %v866, %v937
    %939 = vmatmul.f32.gmra.mxu0 %v883
    %v940 = vpop.f32.mrf.mxu0
    %v941 = vadd.f32 %v871, %v940
    %942 = vdwg.mxu0
    %943 = vmatpush.msra.mxu0 0.0
    %944 = vmatpush.msra.mxu0 0.0
    %945 = vmatpush.msra.mxu0 0.0
    %946 = vmatpush.msra.mxu0 0.0
    %947 = vmatpush.msra.mxu0 0.0
    %948 = vmatpush.msra.mxu0 0.0
    %949 = vmatpush.msra.mxu0 0.0
    %950 = vmatpush.msra.mxu0 0.0
    %951 = vmatpush.msra.mxu0 %v843
    %952 = vmatpush.msra.mxu0 %v839
    %953 = vmatpush.msra.mxu0 %v835
    %954 = vmatpush.msra.mxu0 %v831
    %955 = vmatpush.msra.mxu0 %v827
    %956 = vmatpush.msra.mxu0 %v823
    %957 = vmatpush.msra.mxu0 %v819
    %958 = vmatpush.msra.mxu0 %v815
    %959 = vmatmul.f32.gmra.mxu0 %v874
    %v960 = vpop.f32.mrf.mxu0
    %v961 = vadd.f32 %v856, %v960
    %962 = vmatmul.f32.gmra.mxu0 %v877
    %v963 = vpop.f32.mrf.mxu0
    %v964 = vadd.f32 %v861, %v963
    %965 = vmatmul.f32.gmra.mxu0 %v880
    %v966 = vpop.f32.mrf.mxu0
    %v967 = vadd.f32 %v866, %v966
    %968 = vmatmul.f32.gmra.mxu0 %v883
    %v969 = vpop.f32.mrf.mxu0
    %v970 = vadd.f32 %v871, %v969
    %971 = vdwg.mxu0
    %972 = vmatpush.msra.mxu0 0.0
    %973 = vmatpush.msra.mxu0 0.0
    %974 = vmatpush.msra.mxu0 0.0
    %975 = vmatpush.msra.mxu0 0.0
    %976 = vmatpush.msra.mxu0 0.0
    %977 = vmatpush.msra.mxu0 0.0
    %978 = vmatpush.msra.mxu0 0.0
    %979 = vmatpush.msra.mxu0 0.0
    %980 = vmatpush.msra.mxu0 %v844
    %981 = vmatpush.msra.mxu0 %v840
    %982 = vmatpush.msra.mxu0 %v836
    %983 = vmatpush.msra.mxu0 %v832
    %984 = vmatpush.msra.mxu0 %v828
    %985 = vmatpush.msra.mxu0 %v824
    %986 = vmatpush.msra.mxu0 %v820
    %987 = vmatpush.msra.mxu0 %v816
    %988 = vmatmul.f32.gmra.mxu0 %v874
    %v989 = vpop.f32.mrf.mxu0
    %v990 = vadd.f32 %v856, %v989
    %991 = vmatmul.f32.gmra.mxu0 %v877
    %v992 = vpop.f32.mrf.mxu0
    %v993 = vadd.f32 %v861, %v992
    %994 = vmatmul.f32.gmra.mxu0 %v880
    %v995 = vpop.f32.mrf.mxu0
    %v996 = vadd.f32 %v866, %v995
    %997 = vmatmul.f32.gmra.mxu0 %v883
    %v998 = vpop.f32.mrf.mxu0
    %v999 = vadd.f32 %v871, %v998
    %1000 = vdwg.mxu0
    %v1001 = vmax.f32 %v903, 0.0
    %v1002 = vmax.f32 %v932, 0.0
    %v1003 = vmax.f32 %v961, 0.0
    %v1004 = vmax.f32 %v990, 0.0
    %v1005 = vmax.f32 %v906, 0.0
    %v1006 = vmax.f32 %v935, 0.0
    %v1007 = vmax.f32 %v964, 0.0
    %v1008 = vmax.f32 %v993, 0.0
    %v1009 = vmax.f32 %v909, 0.0
    %v1010 = vmax.f32 %v938, 0.0
    %v1011 = vmax.f32 %v967, 0.0
    %v1012 = vmax.f32 %v996, 0.0
    %v1013 = vmax.f32 %v912, 0.0
    %v1014 = vmax.f32 %v941, 0.0
    %v1015 = vmax.f32 %v970, 0.0
    %v1016 = vmax.f32 %v999, 0.0
    %v1017 = vld [vmem:[%s7] sm:$0xff]
    %v1018 = vld [vmem:[%s7 + $0x8] sm:$0xff]
    %v1019 = vld [vmem:[%s7 + $0x10] sm:$0xff]
    %v1020 = vld [vmem:[%s7 + $0x18] sm:$0xff]
    %1022 = vset.pattern.permute.xlu0 0
    %1023 = vperm.xlu0 %1022, %v1017
    %v1024 = vpop.permute.xlu0 %1023
    %1027 = vset.pattern.permute.xlu0 0
    %1028 = vperm.xlu0 %1027, %v1018
    %v1029 = vpop.permute.xlu0 %1028
    %1032 = vset.pattern.permute.xlu0 0
    %1033 = vperm.xlu0 %1032, %v1019
    %v1034 = vpop.permute.xlu0 %1033
    %1037 = vset.pattern.permute.xlu0 0
    %1038 = vperm.xlu0 %1037, %v1020
    %v1039 = vpop.permute.xlu0 %1038
    %v1041 = vmul.f32 %v1001, %v1024
    %v1042 = vmul.f32 %v1002, %v1024
    %v1043 = vmul.f32 %v1003, %v1024
    %v1044 = vmul.f32 %v1004, %v1024
    %v1045 = vmul.f32 %v1005, %v1029
    %v1046 = vmul.f32 %v1006, %v1029
    %v1047 = vmul.f32 %v1007, %v1029
    %v1048 = vmul.f32 %v1008, %v1029
    %v1049 = vmul.f32 %v1009, %v1034
    %v1050 = vmul.f32 %v1010, %v1034
    %v1051 = vmul.f32 %v1011, %v1034
    %v1052 = vmul.f32 %v1012, %v1034
    %v1053 = vmul.f32 %v1013, %v1039
    %v1054 = vmul.f32 %v1014, %v1039
    %v1055 = vmul.f32 %v1015, %v1039
    %v1056 = vmul.f32 %v1016, %v1039
    %v1057 = vadd.f32 %v1041, %v1045
    %v1058 = vadd.f32 %v1057, %v1049
    %v1059 = vadd.f32 %v1058, %v1053
    %v1060 = vrot.slane %v1059, 4
    %v1061 = vadd.f32 %v1059, %v1060
    %v1062 = vrot.slane %v1061, 2
    %v1063 = vadd.f32 %v1061, %v1062
    %v1064 = vrot.slane %v1063, 1
    %v1065 = vadd.f32 %v1063, %v1064
    %v1066 = vadd.f32 %v1042, %v1046
    %v1067 = vadd.f32 %v1066, %v1050
    %v1068 = vadd.f32 %v1067, %v1054
    %v1069 = vrot.slane %v1068, 4
    %v1070 = vadd.f32 %v1068, %v1069
    %v1071 = vrot.slane %v1070, 2
    %v1072 = vadd.f32 %v1070, %v1071
    %v1073 = vrot.slane %v1072, 1
    %v1074 = vadd.f32 %v1072, %v1073
    %v1075 = vadd.f32 %v1043, %v1047
    %v1076 = vadd.f32 %v1075, %v1051
    %v1077 = vadd.f32 %v1076, %v1055
    %v1078 = vrot.slane %v1077, 4
    %v1079 = vadd.f32 %v1077, %v1078
    %v1080 = vrot.slane %v1079, 2
    %v1081 = vadd.f32 %v1079, %v1080
    %v1082 = vrot.slane %v1081, 1
    %v1083 = vadd.f32 %v1081, %v1082
    %v1084 = vadd.f32 %v1044, %v1048
    %v1085 = vadd.f32 %v1084, %v1052
    %v1086 = vadd.f32 %v1085, %v1056
    %v1087 = vrot.slane %v1086, 4
    %v1088 = vadd.f32 %v1086, %v1087
    %v1089 = vrot.slane %v1088, 2
    %v1090 = vadd.f32 %v1088, %v1089
    %v1091 = vrot.slane %v1090, 1
    %v1092 = vadd.f32 %v1090, %v1091
    %v1093 = vld [vmem:[#allocation2] sm:$0x1]
    %1095 = vset.pattern.permute.xlu0 0
    %1096 = vperm.xlu0 %1095, %v1093
    %v1097 = vpop.permute.xlu0 %1096
    %v1099 = vperm.slane %v1097, 0
    %v1100 = vadd.f32 %v1065, %v1099
    %v1101 = vadd.f32 %v1074, %v1099
    %v1102 = vadd.f32 %v1083, %v1099
    %v1103 = vadd.f32 %v1092, %v1099
    %v1104 = vsub.f32 0.0, %v1100
    %v1105 = vsub.f32 0.0, %v1101
    %v1106 = vsub.f32 0.0, %v1102
    %v1107 = vsub.f32 0.0, %v1103
    %v1108 = vmul.f32 %v1104, 1.442695
    %v1109 = vpow.pop %v1108
    %v1110 = vmul.f32 %v1105, 1.442695
    %v1111 = vpow.pop %v1110
    %v1112 = vmul.f32 %v1106, 1.442695
    %v1113 = vpow.pop %v1112
    %v1114 = vmul.f32 %v1107, 1.442695
    %v1115 = vpow.pop %v1114
    %v1116 = vadd.f32 %v1109, 1.0
    %v1117 = vadd.f32 %v1111, 1.0
    %v1118 = vadd.f32 %v1113, 1.0
    %v1119 = vadd.f32 %v1115, 1.0
    %v1120 = vrcp.pop %v1116
    %v1121 = vmul.f32 %v1116, %v1120
    %v1122 = vsub.f32 1.0, %v1121
    %v1123 = vmul.f32 %v1120, %v1122
    %v1124 = vadd.f32 %v1120, %v1123
    %vm1125 = vweird.f32 %v1116
    %vm1126 = vweird.f32 %v1120
    %vm1127 = vmor %vm1125, %vm1126
    %v1128 = vsel %vm1127, %v1120, %v1124
    %v1129 = vand.u32 2147483647, %v1116
    %vm1130 = vcmp.eq.f32.partialorder %v1129, 8.507059e+37
    %v1131 = vand.u32 %v1116, 2147483648
    %v1132 = vor.u32 1.1754944e-38, %v1131
    %v1133 = vsel %vm1130, %v1132, %v1128
    %v1134 = vmul.f32 1.0, %v1133
    %v1135 = vrcp.pop %v1117
    %v1136 = vmul.f32 %v1117, %v1135
    %v1137 = vsub.f32 1.0, %v1136
    %v1138 = vmul.f32 %v1135, %v1137
    %v1139 = vadd.f32 %v1135, %v1138
    %vm1140 = vweird.f32 %v1117
    %vm1141 = vweird.f32 %v1135
    %vm1142 = vmor %vm1140, %vm1141
    %v1143 = vsel %vm1142, %v1135, %v1139
    %v1144 = vand.u32 2147483647, %v1117
    %vm1145 = vcmp.eq.f32.partialorder %v1144, 8.507059e+37
    %v1146 = vand.u32 %v1117, 2147483648
    %v1147 = vor.u32 1.1754944e-38, %v1146
    %v1148 = vsel %vm1145, %v1147, %v1143
    %v1149 = vmul.f32 1.0, %v1148
    %v1150 = vrcp.pop %v1118
    %v1151 = vmul.f32 %v1118, %v1150
    %v1152 = vsub.f32 1.0, %v1151
    %v1153 = vmul.f32 %v1150, %v1152
    %v1154 = vadd.f32 %v1150, %v1153
    %vm1155 = vweird.f32 %v1118
    %vm1156 = vweird.f32 %v1150
    %vm1157 = vmor %vm1155, %vm1156
    %v1158 = vsel %vm1157, %v1150, %v1154
    %v1159 = vand.u32 2147483647, %v1118
    %vm1160 = vcmp.eq.f32.partialorder %v1159, 8.507059e+37
    %v1161 = vand.u32 %v1118, 2147483648
    %v1162 = vor.u32 1.1754944e-38, %v1161
    %v1163 = vsel %vm1160, %v1162, %v1158
    %v1164 = vmul.f32 1.0, %v1163
    %v1165 = vrcp.pop %v1119
    %v1166 = vmul.f32 %v1119, %v1165
    %v1167 = vsub.f32 1.0, %v1166
    %v1168 = vmul.f32 %v1165, %v1167
    %v1169 = vadd.f32 %v1165, %v1168
    %vm1170 = vweird.f32 %v1119
    %vm1171 = vweird.f32 %v1165
    %vm1172 = vmor %vm1170, %vm1171
    %v1173 = vsel %vm1172, %v1165, %v1169
    %v1174 = vand.u32 2147483647, %v1119
    %vm1175 = vcmp.eq.f32.partialorder %v1174, 8.507059e+37
    %v1176 = vand.u32 %v1119, 2147483648
    %v1177 = vor.u32 1.1754944e-38, %v1176
    %v1178 = vsel %vm1175, %v1177, %v1173
    %v1179 = vmul.f32 1.0, %v1178
    %v1184 = vrot.slane %v1149, 7
    %v1185 = vrot.slane %v1164, 6
    %v1186 = vrot.slane %v1179, 5
    %vm1187 = vcmask 1040384
    %v1188 = vsel %vm1187, %v1134, %v1184
    %vm1189 = vcmask 1042434
    %v1190 = vsel %vm1189, %v1185, %v1186
    %vm1191 = vcmask 1041408
    %v1192 = vsel %vm1191, %v1188, %v1190
    %v1194 = vlaneseq
    %vm1195 = vcmp.ge.s32.totalorder %v1194, 0
    %vm1196 = vcmp.lt.s32.totalorder %v1194, 512
    %vm1197 = vmand %vm1195, %vm1196
    %1198 = vst.msk [vmem:[#allocation3] sm:$0xf] %vm1197, %v1192
    // Predicated region
    $region38: #{discriminator_forward.1} parent=1 // pred_check
      _
    $region39: #{discriminator_forward.1} parent=1 // pred_check_branch
      %1200 = sbr.rel (0) target = $region41
    $region40: #{discriminator_forward.1} parent=1 // pred_region
      %1202 = vsyncadd [#allocation4], 0
      %s1204 = sshll.u32 [#allocation3], 4
      %s1205 = int_to_ptr.vmem [resolvable:$true] %s1204
      %s1206 = sshll.u32 %s9, 4
      %s1207 = int_to_ptr.hbm [resolvable:$true] %s1206
      %1209 = dma.vmem_to_hbm [thread:$0]  %s1205, 64, %s1207, [#allocation4]
    $region41: #{discriminator_forward.1} parent=1 // pred_fallthru
      _
    // Predicated region
    $region42: #{discriminator_forward.1} parent=1 // pred_check
      _
    $region43: #{discriminator_forward.1} parent=1 // pred_check_branch
      %1211 = sbr.rel (0) target = $region45
    $region44: #{discriminator_forward.1} parent=1 // pred_region
      %1213 = dma.done [#allocation4], 64
    $region45: #{discriminator_forward.1} parent=1 // pred_fallthru
      _
    %1214 = vsyncpa [#allocation4], 1

</llo_original>
